<compile_context>
chip_gen: v6e
topology: v6e:2x2x1
jax: 0.10.0
libtpu: 0.0.40
codegen_flags: <defaults>
</compile_context>

<pallas_src>
import functools

import numpy as np
import jax
import jax.numpy as jnp
from jax.experimental import pallas as pl
from jax.experimental.pallas import tpu as pltpu

BN_EPS = 1e-5  # PyTorch BatchNorm1d default


# ---------------------------------------------------------------------------
# Fused kernel factory (all shapes are static Python ints baked at trace time)
# ---------------------------------------------------------------------------
def _make_kernel(*, B, C_in, C, K, L):
    L1 = (L - K) // 2 + 1
    L2 = (L1 - K) // 2 + 1
    L3 = (L2 - K) // 2 + 1
    assert L3 == 1, f"Reshape(out_channels) requires final conv length 1, got {L3}"
    KC = K * C
    H = 3 * C

    def kernel(x_ref, mat_ref, vec_ref, o_ref, p_ref, h_ref):
        f32 = jnp.float32

        def tap_sum(l_in, l_out):
            # y[(b,t), co] = sum_k P[(b, 2t + k), k*C + co]
            # strided sublane reads (stride=2) replace the old per-tap gather matmuls.
            for b in range(B):
                acc = None
                for k in range(K):
                    rows = p_ref[pl.ds(b * l_in + k, l_out, stride=2), :]  # (l_out, KC)
                    blk = rows[:, k * C:(k + 1) * C]                       # (l_out, C)
                    acc = blk if acc is None else acc + blk
                h_ref[b * l_out:(b + 1) * l_out, :] = acc
            return h_ref[0:B * l_out, :]                                   # (B*l_out, C)

        def bn_relu(y, row):
            # train-mode BatchNorm1d over all (batch, length) rows, biased variance.
            gamma = vec_ref[row:row + 1, 0:C]
            beta = vec_ref[row + 1:row + 2, 0:C]
            mean = jnp.mean(y, axis=0, keepdims=True)
            var = jnp.mean((y - mean) ** 2, axis=0, keepdims=True)
            normed = (y - mean) * jax.lax.rsqrt(var + BN_EPS)
            return jnp.maximum(normed * gamma + beta, 0.0)

        # -------- stage 1: conv1 (NCL permutation folded into a transposed-LHS matmul)
        w1 = mat_ref[0, 0:C_in, 0:KC]                                      # (C_in, KC)
        for b in range(B):
            xb = x_ref[b]                                                  # (C_in, L)
            p_ref[b * L:(b + 1) * L, :] = jax.lax.dot_general(
                xb, w1, (((0,), (0,)), ((), ())),                          # contract C_in
                preferred_element_type=f32)                                # (L, KC)
        h = bn_relu(tap_sum(L, L1), 0)                                     # (B*L1, C)

        # -------- stage 2
        w2 = mat_ref[1, 0:C, 0:KC]
        p_ref[0:B * L1, :] = jnp.dot(h, w2, preferred_element_type=f32)
        h = bn_relu(tap_sum(L1, L2), 2)                                    # (B*L2, C)

        # -------- stage 3
        w3 = mat_ref[2, 0:C, 0:KC]
        p_ref[0:B * L2, :] = jnp.dot(h, w3, preferred_element_type=f32)
        h = bn_relu(tap_sum(L2, L3), 4)                                    # (B, C), L3 == 1

        # -------- MLP head (fc2 is lane-dense: 128-wide padded slab)
        fc1w = mat_ref[3, 0:C, 0:H]                                        # (C, H)
        fc1b = vec_ref[6:7, 0:H]                                           # (1, H)
        h = jnp.maximum(jnp.dot(h, fc1w, preferred_element_type=f32) + fc1b, 0.0)

        fc2w = mat_ref[4, 0:H, :]                                          # (H, 128)
        fc2b = vec_ref[7:8, :]                                             # (1, 128), -1e30 pad
        logits = jnp.dot(h, fc2w, preferred_element_type=f32) + fc2b

        m = jnp.max(logits, axis=-1, keepdims=True)
        e = jnp.exp(logits - m)                 # padded lanes underflow to exactly 0
        s = jnp.sum(e, axis=-1, keepdims=True)
        r = pl.reciprocal(s, approx=True)
        r = r * (2.0 - s * r)                   # one Newton step -> rows sum to 1 (~1e-6)
        o_ref[...] = (e * r).astype(o_ref.dtype)

    return kernel


# ---------------------------------------------------------------------------
# One-time (outside jit) weight packing: 2 parameter slabs, matmul-ready layout
# ---------------------------------------------------------------------------
def prepare_kernel_args(params, num_classes):
    C, C_in, K = params["conv1_w"].shape           # PyTorch Conv1d layout (C_out, C_in, K)
    H = 3 * C
    KC = K * C
    n_pad = 128 * ((num_classes + 127) // 128)     # lane-dense output slab width
    n_cols = max(KC, H, n_pad)
    n_rows = max(C_in, C, H)

    def w_cat(w):
        # (C_out, C_in_w, K) -> (C_in_w, K*C_out):  w_cat[ci, k*C_out + co] = w[co, ci, k]
        w = np.asarray(w, np.float32)
        return np.transpose(w, (1, 2, 0)).reshape(w.shape[1], K * w.shape[0])

    mat = np.zeros((5, n_rows, n_cols), np.float32)
    mat[0, :C_in, :KC] = w_cat(params["conv1_w"])
    mat[1, :C, :KC] = w_cat(params["conv2_w"])
    mat[2, :C, :KC] = w_cat(params["conv3_w"])
    mat[3, :C, :H] = np.asarray(params["fc1_w"], np.float32).T             # (C, H)
    mat[4, :H, :num_classes] = np.asarray(params["fc2_w"], np.float32).T   # (H, n_cls)

    vec = np.zeros((8, n_cols), np.float32)
    vec[0, :C] = np.asarray(params["bn1_gamma"]); vec[1, :C] = np.asarray(params["bn1_beta"])
    vec[2, :C] = np.asarray(params["bn2_gamma"]); vec[3, :C] = np.asarray(params["bn2_beta"])
    vec[4, :C] = np.asarray(params["bn3_gamma"]); vec[5, :C] = np.asarray(params["bn3_beta"])
    vec[6, :H] = np.asarray(params["fc1_b"])
    vec[7, :] = -1e30                               # padded logits -> softmax mass exactly 0
    vec[7, :num_classes] = np.asarray(params["fc2_b"])
    # NOTE: conv biases are intentionally omitted — a per-channel constant added before
    # train-mode BatchNorm is exactly cancelled by the mean subtraction.
    return jnp.asarray(mat), jnp.asarray(vec)


# ---------------------------------------------------------------------------
# Forward wrapper (jitted): ONE gridless pallas_call + a final class slice
# ---------------------------------------------------------------------------
def cnn_classifier_forward(x, mat_slab, vec_slab, *, out_channels, kernel_size, num_classes):
    B, C_in, L = x.shape
    C, K = out_channels, kernel_size
    L1 = (L - K) // 2 + 1
    n_pad = mat_slab.shape[-1]

    kernel = _make_kernel(B=B, C_in=C_in, C=C, K=K, L=L)
    vmem = pl.BlockSpec(memory_space=pltpu.MemorySpace.VMEM)
    out = pl.pallas_call(
        kernel,
        out_shape=jax.ShapeDtypeStruct((B, n_pad), jnp.float32),
        in_specs=[vmem, vmem, vmem],
        out_specs=vmem,
        scratch_shapes=[
            pltpu.VMEM((B * L, K * C), jnp.float32),   # per-stage pre-gather matmul output
            pltpu.VMEM((B * L1, C), jnp.float32),      # per-stage gathered activations
        ],
    )(x.astype(jnp.float32), mat_slab, vec_slab)
    return out[:, :num_classes]


# ---------------------------------------------------------------------------
# Parameters (PyTorch layouts) + pure-JAX reference for validation
# ---------------------------------------------------------------------------
def init_params(key, in_channels, out_channels, kernel_size, num_classes):
    keys = jax.random.split(key, 10)

    def normal(k, shape, scale=0.1):
        return scale * jax.random.normal(k, shape, dtype=jnp.float32)

    c = out_channels
    p = {
        "conv1_w": normal(keys[0], (c, in_channels, kernel_size)),
        "conv1_b": normal(keys[1], (c,)),
        "conv2_w": normal(keys[2], (c, c, kernel_size)),
        "conv2_b": normal(keys[3], (c,)),
        "conv3_w": normal(keys[4], (c, c, kernel_size)),
        "conv3_b": normal(keys[5], (c,)),
        "fc1_w": normal(keys[6], (3 * c, c)),
        "fc1_b": normal(keys[7], (3 * c,)),
        "fc2_w": normal(keys[8], (num_classes, 3 * c)),
        "fc2_b": normal(keys[9], (num_classes,)),
    }
    for i in (1, 2, 3):  # BatchNorm1d defaults
        p[f"bn{i}_gamma"] = jnp.ones((c,), jnp.float32)
        p[f"bn{i}_beta"] = jnp.zeros((c,), jnp.float32)
    return p


def reference_forward(params, x, kernel_size):
    stride = 2

    def conv_bn_relu(h, w, b, g, beta):
        y = jax.lax.conv_general_dilated(
            h, w, window_strides=(stride,), padding="VALID",
            dimension_numbers=("NCH", "OIH", "NCH"))
        y = y + b[None, :, None]
        mean = jnp.mean(y, axis=(0, 2), keepdims=True)
        var = jnp.mean((y - mean) ** 2, axis=(0, 2), keepdims=True)
        y = (y - mean) / jnp.sqrt(var + BN_EPS)
        y = y * g[None, :, None] + beta[None, :, None]
        return jnp.maximum(y, 0.0)

    h = conv_bn_relu(x, params["conv1_w"], params["conv1_b"], params["bn1_gamma"], params["bn1_beta"])
    h = conv_bn_relu(h, params["conv2_w"], params["conv2_b"], params["bn2_gamma"], params["bn2_beta"])
    h = conv_bn_relu(h, params["conv3_w"], params["conv3_b"], params["bn3_gamma"], params["bn3_beta"])
    B, C, Lf = h.shape  # Lf == 1
    h = h.reshape(B, C)
    h = jnp.maximum(h @ params["fc1_w"].T + params["fc1_b"], 0.0)
    logits = h @ params["fc2_w"].T + params["fc2_b"]
    return jax.nn.softmax(logits, axis=1)


if __name__ == "__main__":
    # cfg: cnn.in_channels=4, cnn.out_channels=8, cnn.kernel_size=3,
    #      system.num_classes=5, system.batch_size=2, input length=16
    in_channels, out_channels, kernel_size, num_classes = 4, 8, 3, 5
    batch, length = 2, 16  # 16 -> 7 -> 3 -> 1 under kernel=3, stride=2

    key = jax.random.PRNGKey(0)
    pkey, xkey = jax.random.split(key)
    params = init_params(pkey, in_channels, out_channels, kernel_size, num_classes)
    x = jax.random.normal(xkey, (batch, in_channels, length), dtype=jnp.float32)

    mat_slab, vec_slab = prepare_kernel_args(params, num_classes)
    fwd = jax.jit(functools.partial(
        cnn_classifier_forward,
        out_channels=out_channels, kernel_size=kernel_size, num_classes=num_classes))
    out = jax.block_until_ready(fwd(x, mat_slab, vec_slab))

    ref = reference_forward(params, x, kernel_size)

    assert out.shape == (batch, num_classes)
    assert bool(jnp.all(jnp.isfinite(out)))
    # Newton-refined reciprocal -> rows sum to 1 to float32 accuracy.
    assert bool(jnp.allclose(jnp.sum(out, axis=1), 1.0, atol=1e-5))
    # Comparison vs. the XLA reference stays at 1e-2: both paths run matmuls at
    # default (bf16-pass) MXU precision with different accumulation orderings;
    # the slack is NOT hiding the reciprocal approximation anymore.
    assert bool(jnp.allclose(out, ref, atol=1e-2, rtol=1e-2))
    print("KERNEL_OK")
</pallas_src>

<mosaic_0001>
module attributes {stable_mosaic.version = 11 : i64} {
  func.func @kernel(%arg0: memref<2x4x16xf32, #tpu.memory_space<vmem>>, %arg1: memref<5x24x128xf32, #tpu.memory_space<vmem>>, %arg2: memref<8x128xf32, #tpu.memory_space<vmem>>, %arg3: memref<2x128xf32, #tpu.memory_space<vmem>>, %arg4: memref<32x24xf32, #tpu.memory_space<vmem>>, %arg5: memref<14x8xf32, #tpu.memory_space<vmem>>) attributes {dimension_semantics = [], scalar_prefetch = 0 : i64, scratch_operands = 2 : i64, tpu.core_type = #tpu.core_type<tc>} {
    %c0 = arith.constant 0 : index
    %c0_0 = arith.constant 0 : index
    %c0_1 = arith.constant 0 : index
    %0 = vector.load %arg1[%c0, %c0_0, %c0_1] : memref<5x24x128xf32, #tpu.memory_space<vmem>>, vector<1x4x24xf32>
    %1 = vector.shape_cast %0 : vector<1x4x24xf32> to vector<4x24xf32>
    %c0_2 = arith.constant 0 : index
    %c0_3 = arith.constant 0 : index
    %c0_4 = arith.constant 0 : index
    %2 = vector.load %arg0[%c0_2, %c0_3, %c0_4] : memref<2x4x16xf32, #tpu.memory_space<vmem>>, vector<1x4x16xf32>
    %3 = vector.shape_cast %2 : vector<1x4x16xf32> to vector<4x16xf32>
    %cst = arith.constant dense<0.000000e+00> : vector<16x24xf32>
    %4 = tpu.matmul %3, %1, %cst {dimension_numbers = #tpu.dot_dimension_numbers<[0], [0], [1], [1], [0, 1, 1, 1], [], []>} : vector<4x16xf32>, vector<4x24xf32>, vector<16x24xf32> -> vector<16x24xf32>
    %c0_5 = arith.constant 0 : index
    %c0_6 = arith.constant 0 : index
    %5 = vector.load %arg4[%c0_5, %c0_6] : memref<32x24xf32, #tpu.memory_space<vmem>>, vector<16x24xf32>
    tpu.vector_store %arg4[%c0_5, %c0_6], %4 {strides = array<i32>} : memref<32x24xf32, #tpu.memory_space<vmem>>, vector<16x24xf32>,
    %c1 = arith.constant 1 : index
    %c0_7 = arith.constant 0 : index
    %c0_8 = arith.constant 0 : index
    %6 = vector.load %arg0[%c1, %c0_7, %c0_8] : memref<2x4x16xf32, #tpu.memory_space<vmem>>, vector<1x4x16xf32>
    %7 = vector.shape_cast %6 : vector<1x4x16xf32> to vector<4x16xf32>
    %cst_9 = arith.constant dense<0.000000e+00> : vector<16x24xf32>
    %8 = tpu.matmul %7, %1, %cst_9 {dimension_numbers = #tpu.dot_dimension_numbers<[0], [0], [1], [1], [0, 1, 1, 1], [], []>} : vector<4x16xf32>, vector<4x24xf32>, vector<16x24xf32> -> vector<16x24xf32>
    %c16 = arith.constant 16 : index
    %c0_10 = arith.constant 0 : index
    %9 = vector.load %arg4[%c16, %c0_10] : memref<32x24xf32, #tpu.memory_space<vmem>>, vector<16x24xf32>
    tpu.vector_store %arg4[%c16, %c0_10], %8 {strides = array<i32>} : memref<32x24xf32, #tpu.memory_space<vmem>>, vector<16x24xf32>,
    %c0_11 = arith.constant 0 : index
    %c0_12 = arith.constant 0 : index
    %10 = tpu.strided_load %arg4[%c0_11, %c0_12] {strides = array<i32: 2, 1>} : memref<32x24xf32, #tpu.memory_space<vmem>>, vector<7x24xf32>
    %11 = vector.extract_strided_slice %10 {offsets = [0, 0], sizes = [7, 8], strides = [1, 1]} : vector<7x24xf32> to vector<7x8xf32>
    %c1_13 = arith.constant 1 : index
    %c0_14 = arith.constant 0 : index
    %12 = tpu.strided_load %arg4[%c1_13, %c0_14] {strides = array<i32: 2, 1>} : memref<32x24xf32, #tpu.memory_space<vmem>>, vector<7x24xf32>
    %13 = vector.extract_strided_slice %12 {offsets = [0, 8], sizes = [7, 8], strides = [1, 1]} : vector<7x24xf32> to vector<7x8xf32>
    %14 = arith.addf %11, %13 : vector<7x8xf32>
    %c2 = arith.constant 2 : index
    %c0_15 = arith.constant 0 : index
    %15 = tpu.strided_load %arg4[%c2, %c0_15] {strides = array<i32: 2, 1>} : memref<32x24xf32, #tpu.memory_space<vmem>>, vector<7x24xf32>
    %16 = vector.extract_strided_slice %15 {offsets = [0, 16], sizes = [7, 8], strides = [1, 1]} : vector<7x24xf32> to vector<7x8xf32>
    %17 = arith.addf %14, %16 : vector<7x8xf32>
    %c0_16 = arith.constant 0 : index
    %c0_17 = arith.constant 0 : index
    %18 = vector.load %arg5[%c0_16, %c0_17] : memref<14x8xf32, #tpu.memory_space<vmem>>, vector<7x8xf32>
    tpu.vector_store %arg5[%c0_16, %c0_17], %17 {strides = array<i32>} : memref<14x8xf32, #tpu.memory_space<vmem>>, vector<7x8xf32>,
    %c16_18 = arith.constant 16 : index
    %c0_19 = arith.constant 0 : index
    %19 = tpu.strided_load %arg4[%c16_18, %c0_19] {strides = array<i32: 2, 1>} : memref<32x24xf32, #tpu.memory_space<vmem>>, vector<7x24xf32>
    %20 = vector.extract_strided_slice %19 {offsets = [0, 0], sizes = [7, 8], strides = [1, 1]} : vector<7x24xf32> to vector<7x8xf32>
    %c17 = arith.constant 17 : index
    %c0_20 = arith.constant 0 : index
    %21 = tpu.strided_load %arg4[%c17, %c0_20] {strides = array<i32: 2, 1>} : memref<32x24xf32, #tpu.memory_space<vmem>>, vector<7x24xf32>
    %22 = vector.extract_strided_slice %21 {offsets = [0, 8], sizes = [7, 8], strides = [1, 1]} : vector<7x24xf32> to vector<7x8xf32>
    %23 = arith.addf %20, %22 : vector<7x8xf32>
    %c18 = arith.constant 18 : index
    %c0_21 = arith.constant 0 : index
    %24 = tpu.strided_load %arg4[%c18, %c0_21] {strides = array<i32: 2, 1>} : memref<32x24xf32, #tpu.memory_space<vmem>>, vector<7x24xf32>
    %25 = vector.extract_strided_slice %24 {offsets = [0, 16], sizes = [7, 8], strides = [1, 1]} : vector<7x24xf32> to vector<7x8xf32>
    %26 = arith.addf %23, %25 : vector<7x8xf32>
    %c7 = arith.constant 7 : index
    %c0_22 = arith.constant 0 : index
    %27 = vector.load %arg5[%c7, %c0_22] : memref<14x8xf32, #tpu.memory_space<vmem>>, vector<7x8xf32>
    tpu.vector_store %arg5[%c7, %c0_22], %26 {strides = array<i32>} : memref<14x8xf32, #tpu.memory_space<vmem>>, vector<7x8xf32>,
    %c0_23 = arith.constant 0 : index
    %c0_24 = arith.constant 0 : index
    %28 = vector.load %arg5[%c0_23, %c0_24] : memref<14x8xf32, #tpu.memory_space<vmem>>, vector<14x8xf32>
    %c0_25 = arith.constant 0 : index
    %c0_26 = arith.constant 0 : index
    %29 = vector.load %arg2[%c0_25, %c0_26] : memref<8x128xf32, #tpu.memory_space<vmem>>, vector<1x8xf32>
    %c1_27 = arith.constant 1 : index
    %c0_28 = arith.constant 0 : index
    %30 = vector.load %arg2[%c1_27, %c0_28] : memref<8x128xf32, #tpu.memory_space<vmem>>, vector<1x8xf32>
    %cst_29 = arith.constant dense<0.000000e+00> : vector<8xf32>
    %31 = vector.multi_reduction <add>, %28, %cst_29 [0] : vector<14x8xf32> to vector<8xf32>
    %32 = vector.shape_cast %31 : vector<8xf32> to vector<1x8xf32>
    %cst_30 = arith.constant 1.400000e+01 : f32
    %33 = vector.broadcast %cst_30 : f32 to vector<1x8xf32>
    %34 = arith.divf %32, %33 : vector<1x8xf32>
    %35 = vector.broadcast %34 : vector<1x8xf32> to vector<14x8xf32>
    %36 = arith.subf %28, %35 : vector<14x8xf32>
    %37 = arith.mulf %36, %36 : vector<14x8xf32>
    %cst_31 = arith.constant dense<0.000000e+00> : vector<8xf32>
    %38 = vector.multi_reduction <add>, %37, %cst_31 [0] : vector<14x8xf32> to vector<8xf32>
    %39 = vector.shape_cast %38 : vector<8xf32> to vector<1x8xf32>
    %cst_32 = arith.constant 1.400000e+01 : f32
    %40 = vector.broadcast %cst_32 : f32 to vector<1x8xf32>
    %41 = arith.divf %39, %40 : vector<1x8xf32>
    %42 = vector.broadcast %34 : vector<1x8xf32> to vector<14x8xf32>
    %43 = arith.subf %28, %42 : vector<14x8xf32>
    %cst_33 = arith.constant 9.99999974E-6 : f32
    %44 = vector.broadcast %cst_33 : f32 to vector<1x8xf32>
    %45 = arith.addf %41, %44 : vector<1x8xf32>
    %46 = math.rsqrt %45 : vector<1x8xf32>
    %47 = vector.broadcast %46 : vector<1x8xf32> to vector<14x8xf32>
    %48 = arith.mulf %43, %47 : vector<14x8xf32>
    %49 = vector.broadcast %29 : vector<1x8xf32> to vector<14x8xf32>
    %50 = arith.mulf %48, %49 : vector<14x8xf32>
    %51 = vector.broadcast %30 : vector<1x8xf32> to vector<14x8xf32>
    %52 = arith.addf %50, %51 : vector<14x8xf32>
    %cst_34 = arith.constant 0.000000e+00 : f32
    %53 = vector.broadcast %cst_34 : f32 to vector<14x8xf32>
    %54 = arith.maximumf %52, %53 : vector<14x8xf32>
    %c1_35 = arith.constant 1 : index
    %c0_36 = arith.constant 0 : index
    %c0_37 = arith.constant 0 : index
    %55 = vector.load %arg1[%c1_35, %c0_36, %c0_37] : memref<5x24x128xf32, #tpu.memory_space<vmem>>, vector<1x8x24xf32>
    %56 = vector.shape_cast %55 : vector<1x8x24xf32> to vector<8x24xf32>
    %cst_38 = arith.constant dense<0.000000e+00> : vector<14x24xf32>
    %57 = tpu.matmul %54, %56, %cst_38 {dimension_numbers = #tpu.dot_dimension_numbers<[1], [0], [0], [1], [0, 0, 1, 1], [], []>} : vector<14x8xf32>, vector<8x24xf32>, vector<14x24xf32> -> vector<14x24xf32>
    %c0_39 = arith.constant 0 : index
    %c0_40 = arith.constant 0 : index
    %58 = vector.load %arg4[%c0_39, %c0_40] : memref<32x24xf32, #tpu.memory_space<vmem>>, vector<14x24xf32>
    tpu.vector_store %arg4[%c0_39, %c0_40], %57 {strides = array<i32>} : memref<32x24xf32, #tpu.memory_space<vmem>>, vector<14x24xf32>,
    %c0_41 = arith.constant 0 : index
    %c0_42 = arith.constant 0 : index
    %59 = tpu.strided_load %arg4[%c0_41, %c0_42] {strides = array<i32: 2, 1>} : memref<32x24xf32, #tpu.memory_space<vmem>>, vector<3x24xf32>
    %60 = vector.extract_strided_slice %59 {offsets = [0, 0], sizes = [3, 8], strides = [1, 1]} : vector<3x24xf32> to vector<3x8xf32>
    %c1_43 = arith.constant 1 : index
    %c0_44 = arith.constant 0 : index
    %61 = tpu.strided_load %arg4[%c1_43, %c0_44] {strides = array<i32: 2, 1>} : memref<32x24xf32, #tpu.memory_space<vmem>>, vector<3x24xf32>
    %62 = vector.extract_strided_slice %61 {offsets = [0, 8], sizes = [3, 8], strides = [1, 1]} : vector<3x24xf32> to vector<3x8xf32>
    %63 = arith.addf %60, %62 : vector<3x8xf32>
    %c2_45 = arith.constant 2 : index
    %c0_46 = arith.constant 0 : index
    %64 = tpu.strided_load %arg4[%c2_45, %c0_46] {strides = array<i32: 2, 1>} : memref<32x24xf32, #tpu.memory_space<vmem>>, vector<3x24xf32>
    %65 = vector.extract_strided_slice %64 {offsets = [0, 16], sizes = [3, 8], strides = [1, 1]} : vector<3x24xf32> to vector<3x8xf32>
    %66 = arith.addf %63, %65 : vector<3x8xf32>
    %c0_47 = arith.constant 0 : index
    %c0_48 = arith.constant 0 : index
    %67 = vector.load %arg5[%c0_47, %c0_48] : memref<14x8xf32, #tpu.memory_space<vmem>>, vector<3x8xf32>
    tpu.vector_store %arg5[%c0_47, %c0_48], %66 {strides = array<i32>} : memref<14x8xf32, #tpu.memory_space<vmem>>, vector<3x8xf32>,
    %c7_49 = arith.constant 7 : index
    %c0_50 = arith.constant 0 : index
    %68 = tpu.strided_load %arg4[%c7_49, %c0_50] {strides = array<i32: 2, 1>} : memref<32x24xf32, #tpu.memory_space<vmem>>, vector<3x24xf32>
    %69 = vector.extract_strided_slice %68 {offsets = [0, 0], sizes = [3, 8], strides = [1, 1]} : vector<3x24xf32> to vector<3x8xf32>
    %c8 = arith.constant 8 : index
    %c0_51 = arith.constant 0 : index
    %70 = tpu.strided_load %arg4[%c8, %c0_51] {strides = array<i32: 2, 1>} : memref<32x24xf32, #tpu.memory_space<vmem>>, vector<3x24xf32>
    %71 = vector.extract_strided_slice %70 {offsets = [0, 8], sizes = [3, 8], strides = [1, 1]} : vector<3x24xf32> to vector<3x8xf32>
    %72 = arith.addf %69, %71 : vector<3x8xf32>
    %c9 = arith.constant 9 : index
    %c0_52 = arith.constant 0 : index
    %73 = tpu.strided_load %arg4[%c9, %c0_52] {strides = array<i32: 2, 1>} : memref<32x24xf32, #tpu.memory_space<vmem>>, vector<3x24xf32>
    %74 = vector.extract_strided_slice %73 {offsets = [0, 16], sizes = [3, 8], strides = [1, 1]} : vector<3x24xf32> to vector<3x8xf32>
    %75 = arith.addf %72, %74 : vector<3x8xf32>
    %c3 = arith.constant 3 : index
    %c0_53 = arith.constant 0 : index
    %76 = vector.load %arg5[%c3, %c0_53] : memref<14x8xf32, #tpu.memory_space<vmem>>, vector<3x8xf32>
    tpu.vector_store %arg5[%c3, %c0_53], %75 {strides = array<i32>} : memref<14x8xf32, #tpu.memory_space<vmem>>, vector<3x8xf32>,
    %c0_54 = arith.constant 0 : index
    %c0_55 = arith.constant 0 : index
    %77 = vector.load %arg5[%c0_54, %c0_55] : memref<14x8xf32, #tpu.memory_space<vmem>>, vector<6x8xf32>
    %c2_56 = arith.constant 2 : index
    %c0_57 = arith.constant 0 : index
    %78 = vector.load %arg2[%c2_56, %c0_57] : memref<8x128xf32, #tpu.memory_space<vmem>>, vector<1x8xf32>
    %c3_58 = arith.constant 3 : index
    %c0_59 = arith.constant 0 : index
    %79 = vector.load %arg2[%c3_58, %c0_59] : memref<8x128xf32, #tpu.memory_space<vmem>>, vector<1x8xf32>
    %cst_60 = arith.constant dense<0.000000e+00> : vector<8xf32>
    %80 = vector.multi_reduction <add>, %77, %cst_60 [0] : vector<6x8xf32> to vector<8xf32>
    %81 = vector.shape_cast %80 : vector<8xf32> to vector<1x8xf32>
    %cst_61 = arith.constant 6.000000e+00 : f32
    %82 = vector.broadcast %cst_61 : f32 to vector<1x8xf32>
    %83 = arith.divf %81, %82 : vector<1x8xf32>
    %84 = vector.broadcast %83 : vector<1x8xf32> to vector<6x8xf32>
    %85 = arith.subf %77, %84 : vector<6x8xf32>
    %86 = arith.mulf %85, %85 : vector<6x8xf32>
    %cst_62 = arith.constant dense<0.000000e+00> : vector<8xf32>
    %87 = vector.multi_reduction <add>, %86, %cst_62 [0] : vector<6x8xf32> to vector<8xf32>
    %88 = vector.shape_cast %87 : vector<8xf32> to vector<1x8xf32>
    %cst_63 = arith.constant 6.000000e+00 : f32
    %89 = vector.broadcast %cst_63 : f32 to vector<1x8xf32>
    %90 = arith.divf %88, %89 : vector<1x8xf32>
    %91 = vector.broadcast %83 : vector<1x8xf32> to vector<6x8xf32>
    %92 = arith.subf %77, %91 : vector<6x8xf32>
    %cst_64 = arith.constant 9.99999974E-6 : f32
    %93 = vector.broadcast %cst_64 : f32 to vector<1x8xf32>
    %94 = arith.addf %90, %93 : vector<1x8xf32>
    %95 = math.rsqrt %94 : vector<1x8xf32>
    %96 = vector.broadcast %95 : vector<1x8xf32> to vector<6x8xf32>
    %97 = arith.mulf %92, %96 : vector<6x8xf32>
    %98 = vector.broadcast %78 : vector<1x8xf32> to vector<6x8xf32>
    %99 = arith.mulf %97, %98 : vector<6x8xf32>
    %100 = vector.broadcast %79 : vector<1x8xf32> to vector<6x8xf32>
    %101 = arith.addf %99, %100 : vector<6x8xf32>
    %cst_65 = arith.constant 0.000000e+00 : f32
    %102 = vector.broadcast %cst_65 : f32 to vector<6x8xf32>
    %103 = arith.maximumf %101, %102 : vector<6x8xf32>
    %c2_66 = arith.constant 2 : index
    %c0_67 = arith.constant 0 : index
    %c0_68 = arith.constant 0 : index
    %104 = vector.load %arg1[%c2_66, %c0_67, %c0_68] : memref<5x24x128xf32, #tpu.memory_space<vmem>>, vector<1x8x24xf32>
    %105 = vector.shape_cast %104 : vector<1x8x24xf32> to vector<8x24xf32>
    %cst_69 = arith.constant dense<0.000000e+00> : vector<6x24xf32>
    %106 = tpu.matmul %103, %105, %cst_69 {dimension_numbers = #tpu.dot_dimension_numbers<[1], [0], [0], [1], [0, 0, 1, 1], [], []>} : vector<6x8xf32>, vector<8x24xf32>, vector<6x24xf32> -> vector<6x24xf32>
    %c0_70 = arith.constant 0 : index
    %c0_71 = arith.constant 0 : index
    %107 = vector.load %arg4[%c0_70, %c0_71] : memref<32x24xf32, #tpu.memory_space<vmem>>, vector<6x24xf32>
    tpu.vector_store %arg4[%c0_70, %c0_71], %106 {strides = array<i32>} : memref<32x24xf32, #tpu.memory_space<vmem>>, vector<6x24xf32>,
    %c0_72 = arith.constant 0 : index
    %c0_73 = arith.constant 0 : index
    %108 = tpu.strided_load %arg4[%c0_72, %c0_73] {strides = array<i32: 2, 1>} : memref<32x24xf32, #tpu.memory_space<vmem>>, vector<1x24xf32>
    %109 = vector.extract_strided_slice %108 {offsets = [0, 0], sizes = [1, 8], strides = [1, 1]} : vector<1x24xf32> to vector<1x8xf32>
    %c1_74 = arith.constant 1 : index
    %c0_75 = arith.constant 0 : index
    %110 = tpu.strided_load %arg4[%c1_74, %c0_75] {strides = array<i32: 2, 1>} : memref<32x24xf32, #tpu.memory_space<vmem>>, vector<1x24xf32>
    %111 = vector.extract_strided_slice %110 {offsets = [0, 8], sizes = [1, 8], strides = [1, 1]} : vector<1x24xf32> to vector<1x8xf32>
    %112 = arith.addf %109, %111 : vector<1x8xf32>
    %c2_76 = arith.constant 2 : index
    %c0_77 = arith.constant 0 : index
    %113 = tpu.strided_load %arg4[%c2_76, %c0_77] {strides = array<i32: 2, 1>} : memref<32x24xf32, #tpu.memory_space<vmem>>, vector<1x24xf32>
    %114 = vector.extract_strided_slice %113 {offsets = [0, 16], sizes = [1, 8], strides = [1, 1]} : vector<1x24xf32> to vector<1x8xf32>
    %115 = arith.addf %112, %114 : vector<1x8xf32>
    %c0_78 = arith.constant 0 : index
    %c0_79 = arith.constant 0 : index
    %116 = vector.load %arg5[%c0_78, %c0_79] : memref<14x8xf32, #tpu.memory_space<vmem>>, vector<1x8xf32>
    tpu.vector_store %arg5[%c0_78, %c0_79], %115 {strides = array<i32>} : memref<14x8xf32, #tpu.memory_space<vmem>>, vector<1x8xf32>,
    %c3_80 = arith.constant 3 : index
    %c0_81 = arith.constant 0 : index
    %117 = tpu.strided_load %arg4[%c3_80, %c0_81] {strides = array<i32: 2, 1>} : memref<32x24xf32, #tpu.memory_space<vmem>>, vector<1x24xf32>
    %118 = vector.extract_strided_slice %117 {offsets = [0, 0], sizes = [1, 8], strides = [1, 1]} : vector<1x24xf32> to vector<1x8xf32>
    %c4 = arith.constant 4 : index
    %c0_82 = arith.constant 0 : index
    %119 = tpu.strided_load %arg4[%c4, %c0_82] {strides = array<i32: 2, 1>} : memref<32x24xf32, #tpu.memory_space<vmem>>, vector<1x24xf32>
    %120 = vector.extract_strided_slice %119 {offsets = [0, 8], sizes = [1, 8], strides = [1, 1]} : vector<1x24xf32> to vector<1x8xf32>
    %121 = arith.addf %118, %120 : vector<1x8xf32>
    %c5 = arith.constant 5 : index
    %c0_83 = arith.constant 0 : index
    %122 = tpu.strided_load %arg4[%c5, %c0_83] {strides = array<i32: 2, 1>} : memref<32x24xf32, #tpu.memory_space<vmem>>, vector<1x24xf32>
    %123 = vector.extract_strided_slice %122 {offsets = [0, 16], sizes = [1, 8], strides = [1, 1]} : vector<1x24xf32> to vector<1x8xf32>
    %124 = arith.addf %121, %123 : vector<1x8xf32>
    %c1_84 = arith.constant 1 : index
    %c0_85 = arith.constant 0 : index
    %125 = vector.load %arg5[%c1_84, %c0_85] : memref<14x8xf32, #tpu.memory_space<vmem>>, vector<1x8xf32>
    tpu.vector_store %arg5[%c1_84, %c0_85], %124 {strides = array<i32>} : memref<14x8xf32, #tpu.memory_space<vmem>>, vector<1x8xf32>,
    %c0_86 = arith.constant 0 : index
    %c0_87 = arith.constant 0 : index
    %126 = vector.load %arg5[%c0_86, %c0_87] : memref<14x8xf32, #tpu.memory_space<vmem>>, vector<2x8xf32>
    %c4_88 = arith.constant 4 : index
    %c0_89 = arith.constant 0 : index
    %127 = vector.load %arg2[%c4_88, %c0_89] : memref<8x128xf32, #tpu.memory_space<vmem>>, vector<1x8xf32>
    %c5_90 = arith.constant 5 : index
    %c0_91 = arith.constant 0 : index
    %128 = vector.load %arg2[%c5_90, %c0_91] : memref<8x128xf32, #tpu.memory_space<vmem>>, vector<1x8xf32>
    %cst_92 = arith.constant dense<0.000000e+00> : vector<8xf32>
    %129 = vector.multi_reduction <add>, %126, %cst_92 [0] : vector<2x8xf32> to vector<8xf32>
    %130 = vector.shape_cast %129 : vector<8xf32> to vector<1x8xf32>
    %cst_93 = arith.constant 2.000000e+00 : f32
    %131 = vector.broadcast %cst_93 : f32 to vector<1x8xf32>
    %132 = arith.divf %130, %131 : vector<1x8xf32>
    %133 = vector.broadcast %132 : vector<1x8xf32> to vector<2x8xf32>
    %134 = arith.subf %126, %133 : vector<2x8xf32>
    %135 = arith.mulf %134, %134 : vector<2x8xf32>
    %cst_94 = arith.constant dense<0.000000e+00> : vector<8xf32>
    %136 = vector.multi_reduction <add>, %135, %cst_94 [0] : vector<2x8xf32> to vector<8xf32>
    %137 = vector.shape_cast %136 : vector<8xf32> to vector<1x8xf32>
    %cst_95 = arith.constant 2.000000e+00 : f32
    %138 = vector.broadcast %cst_95 : f32 to vector<1x8xf32>
    %139 = arith.divf %137, %138 : vector<1x8xf32>
    %140 = vector.broadcast %132 : vector<1x8xf32> to vector<2x8xf32>
    %141 = arith.subf %126, %140 : vector<2x8xf32>
    %cst_96 = arith.constant 9.99999974E-6 : f32
    %142 = vector.broadcast %cst_96 : f32 to vector<1x8xf32>
    %143 = arith.addf %139, %142 : vector<1x8xf32>
    %144 = math.rsqrt %143 : vector<1x8xf32>
    %145 = vector.broadcast %144 : vector<1x8xf32> to vector<2x8xf32>
    %146 = arith.mulf %141, %145 : vector<2x8xf32>
    %147 = vector.broadcast %127 : vector<1x8xf32> to vector<2x8xf32>
    %148 = arith.mulf %146, %147 : vector<2x8xf32>
    %149 = vector.broadcast %128 : vector<1x8xf32> to vector<2x8xf32>
    %150 = arith.addf %148, %149 : vector<2x8xf32>
    %cst_97 = arith.constant 0.000000e+00 : f32
    %151 = vector.broadcast %cst_97 : f32 to vector<2x8xf32>
    %152 = arith.maximumf %150, %151 : vector<2x8xf32>
    %c3_98 = arith.constant 3 : index
    %c0_99 = arith.constant 0 : index
    %c0_100 = arith.constant 0 : index
    %153 = vector.load %arg1[%c3_98, %c0_99, %c0_100] : memref<5x24x128xf32, #tpu.memory_space<vmem>>, vector<1x8x24xf32>
    %154 = vector.shape_cast %153 : vector<1x8x24xf32> to vector<8x24xf32>
    %c6 = arith.constant 6 : index
    %c0_101 = arith.constant 0 : index
    %155 = vector.load %arg2[%c6, %c0_101] : memref<8x128xf32, #tpu.memory_space<vmem>>, vector<1x24xf32>
    %cst_102 = arith.constant dense<0.000000e+00> : vector<2x24xf32>
    %156 = tpu.matmul %152, %154, %cst_102 {dimension_numbers = #tpu.dot_dimension_numbers<[1], [0], [0], [1], [0, 0, 1, 1], [], []>} : vector<2x8xf32>, vector<8x24xf32>, vector<2x24xf32> -> vector<2x24xf32>
    %157 = vector.broadcast %155 : vector<1x24xf32> to vector<2x24xf32>
    %158 = arith.addf %156, %157 : vector<2x24xf32>
    %cst_103 = arith.constant 0.000000e+00 : f32
    %159 = vector.broadcast %cst_103 : f32 to vector<2x24xf32>
    %160 = arith.maximumf %158, %159 : vector<2x24xf32>
    %c4_104 = arith.constant 4 : index
    %c0_105 = arith.constant 0 : index
    %c0_106 = arith.constant 0 : index
    %161 = vector.load %arg1[%c4_104, %c0_105, %c0_106] : memref<5x24x128xf32, #tpu.memory_space<vmem>>, vector<1x24x128xf32>
    %162 = vector.shape_cast %161 : vector<1x24x128xf32> to vector<24x128xf32>
    %c7_107 = arith.constant 7 : index
    %c0_108 = arith.constant 0 : index
    %163 = vector.load %arg2[%c7_107, %c0_108] : memref<8x128xf32, #tpu.memory_space<vmem>>, vector<1x128xf32>
    %cst_109 = arith.constant dense<0.000000e+00> : vector<2x128xf32>
    %164 = tpu.matmul %160, %162, %cst_109 {dimension_numbers = #tpu.dot_dimension_numbers<[1], [0], [0], [1], [0, 0, 1, 1], [], []>} : vector<2x24xf32>, vector<24x128xf32>, vector<2x128xf32> -> vector<2x128xf32>
    %165 = vector.broadcast %163 : vector<1x128xf32> to vector<2x128xf32>
    %166 = arith.addf %164, %165 : vector<2x128xf32>
    %cst_110 = arith.constant dense<0xFF800000> : vector<2xf32>
    %167 = vector.multi_reduction <maximumf>, %166, %cst_110 [1] : vector<2x128xf32> to vector<2xf32>
    %168 = vector.shape_cast %167 : vector<2xf32> to vector<2x1xf32>
    %169 = vector.broadcast %168 : vector<2x1xf32> to vector<2x128xf32>
    %170 = arith.subf %166, %169 : vector<2x128xf32>
    %171 = math.exp %170 : vector<2x128xf32>
    %cst_111 = arith.constant dense<0.000000e+00> : vector<2xf32>
    %172 = vector.multi_reduction <add>, %171, %cst_111 [1] : vector<2x128xf32> to vector<2xf32>
    %173 = vector.shape_cast %172 : vector<2xf32> to vector<2x1xf32>
    %174 = tpu.reciprocal %173 {approx = true} : vector<2x1xf32> -> vector<2x1xf32>
    %175 = arith.mulf %173, %174 : vector<2x1xf32>
    %cst_112 = arith.constant 2.000000e+00 : f32
    %176 = vector.broadcast %cst_112 : f32 to vector<2x1xf32>
    %177 = arith.subf %176, %175 : vector<2x1xf32>
    %178 = arith.mulf %174, %177 : vector<2x1xf32>
    %179 = vector.broadcast %178 : vector<2x1xf32> to vector<2x128xf32>
    %180 = arith.mulf %171, %179 : vector<2x128xf32>
    %c0_113 = arith.constant 0 : index
    %c0_114 = arith.constant 0 : index
    %181 = vector.load %arg3[%c0_113, %c0_114] : memref<2x128xf32, #tpu.memory_space<vmem>>, vector<2x128xf32>
    tpu.vector_store %arg3[%c0_113, %c0_114], %180 {strides = array<i32>} : memref<2x128xf32, #tpu.memory_space<vmem>>, vector<2x128xf32>,
    return
  }
}

</mosaic_0001>

<llo_original>
// kernel: cnn_classifier_forward.1
$region0: #{cnn_classifier_forward.1}
  #allocation0 [shape = 'u32[]', space=smem, size = 0x4, offset = 0x4, fixed_abs, tag = 'smem constant byte address 0x4 - core index']
  #allocation1 [shape = 'u32[144,128]{1,0:T(1,128)}', space=vmem, size = 0x12000, scoped, tag = 'internal scratch']
  #allocation2 [shape = 'f32[32,24]{1,0:T(8,128)}', space=vmem, size = 0x4000, scoped, tag = 'scratch operand']
  #allocation3 [shape = 'f32[14,8]{1,0:T(8,128)}', space=vmem, size = 0x2000, scoped, tag = 'scratch operand']
  %s0 = inlined_call_operand.hbm [shape: f32[2,4,16], index: 0, kind: input, shape index: {}]
  %s1 = inlined_call_operand.hbm [shape: f32[5,24,128], index: 1, kind: input, shape index: {}]
  %s2 = inlined_call_operand.hbm [shape: f32[8,128], index: 2, kind: input, shape index: {}]
  %s3 = inlined_call_operand.hbm [shape: f32[2,128], index: 3, kind: output, shape index: {}]
  %s4 = sld [smem:[#allocation0]]
  $region34: #{cnn_classifier_forward.1} parent=0
    _
  %s6 = ssub.s32 1, %s4
  %s7 = scalar_select 0, %s6, %s4
  $region1: #{cnn_classifier_forward.1} parent=0
    #allocation4 [shape = 'u8[4096]{0}', space=vmem, size = 0x1000, scoped, tag = 'input window, operand 0, single buffered']
    #allocation5 [shape = 's32[1]{0}', space=sflag, size = 0x4, scoped, tag = 'scoped memory for cnn_classifier_forward.1']
    #allocation6 [shape = 's32[1]{0}', space=sflag, size = 0x4, scoped, tag = 'scoped memory for cnn_classifier_forward.1']
    #allocation7 [shape = 'u8[61440]{0}', space=vmem, size = 0xf000, scoped, tag = 'input window, operand 1, single buffered']
    #allocation8 [shape = 's32[1]{0}', space=sflag, size = 0x4, scoped, tag = 'scoped memory for cnn_classifier_forward.1']
    #allocation9 [shape = 'u8[4096]{0}', space=vmem, size = 0x1000, scoped, tag = 'input window, operand 2, single buffered']
    #allocation10 [shape = 'u8[1024]{0}', space=vmem, size = 0x400, scoped, tag = 'output window, operand 0, single buffered']
    %8 = vsyncpa [#allocation5], 0
    %9 = vsyncpa [#allocation8], 0
    %10 = vsyncpa [#allocation6], 0
    // Predicated region
    $region2: #{cnn_classifier_forward.1} parent=1 // pred_check
      _
    $region3: #{cnn_classifier_forward.1} parent=1 // pred_check_branch
      %12 = sbr.rel (0) target = $region5
    $region4: #{cnn_classifier_forward.1} parent=1 // pred_region
      %s14 = ssub.s32 128, 128
      %15 = vsyncadd [#allocation5], %s14
      %s16 = sshll.u32 [#allocation4], 4
      %s17 = int_to_ptr.vmem [resolvable:$true] %s16
      %22 = dma.hbm_to_vmem [thread:$0]  %s0, 128, %s17, [#allocation5], 64, 64, 4
    $region5: #{cnn_classifier_forward.1} parent=1 // pred_fallthru
      _
    // Predicated region
    $region6: #{cnn_classifier_forward.1} parent=1 // pred_check
      _
    $region7: #{cnn_classifier_forward.1} parent=1 // pred_check_branch
      %24 = sbr.rel (0) target = $region9
    $region8: #{cnn_classifier_forward.1} parent=1 // pred_region
      %s26 = ssub.s32 1920, 1920
      %27 = vsyncadd [#allocation8], %s26
      %s28 = sshll.u32 [#allocation7], 4
      %s29 = int_to_ptr.vmem [resolvable:$true] %s28
      %34 = dma.hbm_to_vmem [thread:$0]  %s1, 1920, %s29, [#allocation8], 128, 128, 8
    $region9: #{cnn_classifier_forward.1} parent=1 // pred_fallthru
      _
    // Predicated region
    $region10: #{cnn_classifier_forward.1} parent=1 // pred_check
      _
    $region11: #{cnn_classifier_forward.1} parent=1 // pred_check_branch
      %36 = sbr.rel (0) target = $region13
    $region12: #{cnn_classifier_forward.1} parent=1 // pred_region
      %s38 = ssub.s32 128, 128
      %39 = vsyncadd [#allocation8], %s38
      %s41 = sshll.u32 [#allocation9], 4
      %s42 = int_to_ptr.vmem [resolvable:$true] %s41
      %44 = dma.hbm_to_vmem [thread:$0]  %s2, 128, %s42, [#allocation8]
    $region13: #{cnn_classifier_forward.1} parent=1 // pred_fallthru
      _
    // Predicated region
    $region14: #{cnn_classifier_forward.1} parent=1 // pred_check
      _
    $region15: #{cnn_classifier_forward.1} parent=1 // pred_check_branch
      %46 = sbr.rel (0) target = $region17
    $region16: #{cnn_classifier_forward.1} parent=1 // pred_region
      %47 = dma.done [#allocation5], 128
    $region17: #{cnn_classifier_forward.1} parent=1 // pred_fallthru
      _
    // Predicated region
    $region18: #{cnn_classifier_forward.1} parent=1 // pred_check
      _
    $region19: #{cnn_classifier_forward.1} parent=1 // pred_check_branch
      %49 = sbr.rel (0) target = $region21
    $region20: #{cnn_classifier_forward.1} parent=1 // pred_region
      %50 = dma.done [#allocation8], 1920
    $region21: #{cnn_classifier_forward.1} parent=1 // pred_fallthru
      _
    // Predicated region
    $region22: #{cnn_classifier_forward.1} parent=1 // pred_check
      _
    $region23: #{cnn_classifier_forward.1} parent=1 // pred_check_branch
      %52 = sbr.rel (0) target = $region25
    $region24: #{cnn_classifier_forward.1} parent=1 // pred_region
      %53 = dma.done [#allocation8], 128
    $region25: #{cnn_classifier_forward.1} parent=1 // pred_fallthru
      _
    %v54 = vld [vmem:[#allocation7] sm:$0xf]
    %v55 = vld [vmem:[#allocation4] sm:$0xf]
    %56 = vxpose.xlu0.b32.start [1/16] %v55, 128
    %57 = vxpose.xlu0.b32.cont [2/16] 0.0, 128
    %58 = vxpose.xlu0.b32.cont [3/16] 0.0, 128
    %59 = vxpose.xlu0.b32.cont [4/16] 0.0, 128
    %60 = vxpose.xlu0.b32.cont [5/16] 0.0, 128
    %61 = vxpose.xlu0.b32.cont [6/16] 0.0, 128
    %62 = vxpose.xlu0.b32.cont [7/16] 0.0, 128
    %63 = vxpose.xlu0.b32.cont [8/16] 0.0, 128
    %64 = vxpose.xlu0.b32.cont [9/16] 0.0, 128
    %65 = vxpose.xlu0.b32.cont [10/16] 0.0, 128
    %66 = vxpose.xlu0.b32.cont [11/16] 0.0, 128
    %67 = vxpose.xlu0.b32.cont [12/16] 0.0, 128
    %68 = vxpose.xlu0.b32.cont [13/16] 0.0, 128
    %69 = vxpose.xlu0.b32.cont [14/16] 0.0, 128
    %70 = vxpose.xlu0.b32.cont [15/16] 0.0, 128
    %71 = vxpose.xlu0.b32.end [16/16] 0.0, 128
    %v72 = vpop.trf.xlu0
    %v73 = vpop.trf.xlu0
    %v74 = vpop.trf.xlu0
    %v75 = vpop.trf.xlu0
    %v76 = vpop.trf.xlu0
    %v77 = vpop.trf.xlu0
    %v78 = vpop.trf.xlu0
    %v79 = vpop.trf.xlu0
    %v80 = vpop.trf.xlu0
    %v81 = vpop.trf.xlu0
    %v82 = vpop.trf.xlu0
    %v83 = vpop.trf.xlu0
    %v84 = vpop.trf.xlu0
    %v85 = vpop.trf.xlu0
    %v86 = vpop.trf.xlu0
    %v87 = vpop.trf.xlu0
    %vm88 = vcmask 31744
    %v90 = vsel %vm88, %v72, 0
    %v93 = vsel %vm88, %v73, 0
    %vm95 = vcmask 1043456
    %v97 = vsel %vm95, %v54, 0
    %99 = vmatprep.subr.mxu0 0.0
    %100 = vmatpush1.msra.mxu0 0.0
    %101 = vmatprep.subr.mxu0 0.0
    %102 = vmatpush1.msra.mxu0 0.0
    %103 = vmatprep.subr.mxu0 0.0
    %104 = vmatpush1.msra.mxu0 0.0
    %105 = vmatprep.subr.mxu0 0.0
    %106 = vmatpush1.msra.mxu0 0.0
    %107 = vmatprep.subr.mxu0 0.0
    %108 = vmatpush1.msra.mxu0 0.0
    %109 = vmatprep.subr.mxu0 0.0
    %110 = vmatpush1.msra.mxu0 0.0
    %111 = vmatprep.subr.mxu0 0.0
    %112 = vmatpush1.msra.mxu0 0.0
    %113 = vmatprep.subr.mxu0 0.0
    %114 = vmatpush1.msra.mxu0 0.0
    %115 = vmatprep.subr.mxu0 0.0
    %116 = vmatpush1.msra.mxu0 0.0
    %117 = vmatprep.subr.mxu0 0.0
    %118 = vmatpush1.msra.mxu0 0.0
    %119 = vmatprep.subr.mxu0 0.0
    %120 = vmatpush1.msra.mxu0 0.0
    %121 = vmatprep.subr.mxu0 0.0
    %122 = vmatpush1.msra.mxu0 0.0
    %123 = vmatprep.subr.mxu0 0.0
    %124 = vmatpush1.msra.mxu0 0.0
    %125 = vmatprep.subr.mxu0 0.0
    %126 = vmatpush1.msra.mxu0 0.0
    %127 = vmatprep.subr.mxu0 0.0
    %128 = vmatpush1.msra.mxu0 0.0
    %129 = vmatprep.subr.mxu0 0.0
    %130 = vmatpush1.msra.mxu0 %v97
    %131 = vmatprep.subr.mxu0 0.0
    %132 = vmatpush2.msra.mxu0 0.0
    %133 = vmatprep.subr.mxu0 0.0
    %134 = vmatpush2.msra.mxu0 0.0
    %135 = vmatprep.subr.mxu0 0.0
    %136 = vmatpush2.msra.mxu0 0.0
    %137 = vmatprep.subr.mxu0 0.0
    %138 = vmatpush2.msra.mxu0 0.0
    %139 = vmatprep.subr.mxu0 0.0
    %140 = vmatpush2.msra.mxu0 0.0
    %141 = vmatprep.subr.mxu0 0.0
    %142 = vmatpush2.msra.mxu0 0.0
    %143 = vmatprep.subr.mxu0 0.0
    %144 = vmatpush2.msra.mxu0 0.0
    %145 = vmatprep.subr.mxu0 0.0
    %146 = vmatpush2.msra.mxu0 0.0
    %147 = vmatprep.subr.mxu0 0.0
    %148 = vmatpush2.msra.mxu0 0.0
    %149 = vmatprep.subr.mxu0 0.0
    %150 = vmatpush2.msra.mxu0 0.0
    %151 = vmatprep.subr.mxu0 0.0
    %152 = vmatpush2.msra.mxu0 0.0
    %153 = vmatprep.subr.mxu0 0.0
    %154 = vmatpush2.msra.mxu0 0.0
    %155 = vmatprep.subr.mxu0 0.0
    %156 = vmatpush2.msra.mxu0 0.0
    %157 = vmatprep.subr.mxu0 0.0
    %158 = vmatpush2.msra.mxu0 0.0
    %159 = vmatprep.subr.mxu0 0.0
    %160 = vmatpush2.msra.mxu0 0.0
    %161 = vmatprep.subr.mxu0 0.0
    %162 = vmatpush2.msra.mxu0 0.0
    %163 = vmatprep.mubr.f32.mxu0 0.0
    %164 = vmatmul.mubr.f32.gmra.mxu0 %v90
    %v165 = vpop.f32.mrf.mxu0
    %v166 = vadd.f32 0.0, %v165
    %v167 = vpop.f32.mrf.mxu0
    %168 = vmatprep.mubr.f32.mxu0 0.0
    %169 = vmatmul.mubr.f32.gmra.mxu0 %v93
    %v170 = vpop.f32.mrf.mxu0
    %v171 = vadd.f32 0.0, %v170
    %v172 = vpop.f32.mrf.mxu0
    %173 = vdwg.mxu0
    %vm174 = vcmask 195584
    %175 = vst.msk [vmem:[#allocation2] sm:$0xff] %vm174, %v166
    %176 = vst.msk [vmem:[#allocation2 + $0x8] sm:$0xff] %vm174, %v171
    %s177 = scalar_lea.vmem [#allocation4], 4
    %v178 = vld [vmem:[%s177] sm:$0xf]
    %179 = vxpose.xlu0.b32.start [1/16] %v178, 128
    %180 = vxpose.xlu0.b32.cont [2/16] 0.0, 128
    %181 = vxpose.xlu0.b32.cont [3/16] 0.0, 128
    %182 = vxpose.xlu0.b32.cont [4/16] 0.0, 128
    %183 = vxpose.xlu0.b32.cont [5/16] 0.0, 128
    %184 = vxpose.xlu0.b32.cont [6/16] 0.0, 128
    %185 = vxpose.xlu0.b32.cont [7/16] 0.0, 128
    %186 = vxpose.xlu0.b32.cont [8/16] 0.0, 128
    %187 = vxpose.xlu0.b32.cont [9/16] 0.0, 128
    %188 = vxpose.xlu0.b32.cont [10/16] 0.0, 128
    %189 = vxpose.xlu0.b32.cont [11/16] 0.0, 128
    %190 = vxpose.xlu0.b32.cont [12/16] 0.0, 128
    %191 = vxpose.xlu0.b32.cont [13/16] 0.0, 128
    %192 = vxpose.xlu0.b32.cont [14/16] 0.0, 128
    %193 = vxpose.xlu0.b32.cont [15/16] 0.0, 128
    %194 = vxpose.xlu0.b32.end [16/16] 0.0, 128
    %v195 = vpop.trf.xlu0
    %v196 = vpop.trf.xlu0
    %v197 = vpop.trf.xlu0
    %v198 = vpop.trf.xlu0
    %v199 = vpop.trf.xlu0
    %v200 = vpop.trf.xlu0
    %v201 = vpop.trf.xlu0
    %v202 = vpop.trf.xlu0
    %v203 = vpop.trf.xlu0
    %v204 = vpop.trf.xlu0
    %v205 = vpop.trf.xlu0
    %v206 = vpop.trf.xlu0
    %v207 = vpop.trf.xlu0
    %v208 = vpop.trf.xlu0
    %v209 = vpop.trf.xlu0
    %v210 = vpop.trf.xlu0
    %v212 = vsel %vm88, %v195, 0
    %v215 = vsel %vm88, %v196, 0
    %217 = vmatprep.subr.mxu0 0.0
    %218 = vmatpush1.msra.mxu0 0.0
    %219 = vmatprep.subr.mxu0 0.0
    %220 = vmatpush1.msra.mxu0 0.0
    %221 = vmatprep.subr.mxu0 0.0
    %222 = vmatpush1.msra.mxu0 0.0
    %223 = vmatprep.subr.mxu0 0.0
    %224 = vmatpush1.msra.mxu0 0.0
    %225 = vmatprep.subr.mxu0 0.0
    %226 = vmatpush1.msra.mxu0 0.0
    %227 = vmatprep.subr.mxu0 0.0
    %228 = vmatpush1.msra.mxu0 0.0
    %229 = vmatprep.subr.mxu0 0.0
    %230 = vmatpush1.msra.mxu0 0.0
    %231 = vmatprep.subr.mxu0 0.0
    %232 = vmatpush1.msra.mxu0 0.0
    %233 = vmatprep.subr.mxu0 0.0
    %234 = vmatpush1.msra.mxu0 0.0
    %235 = vmatprep.subr.mxu0 0.0
    %236 = vmatpush1.msra.mxu0 0.0
    %237 = vmatprep.subr.mxu0 0.0
    %238 = vmatpush1.msra.mxu0 0.0
    %239 = vmatprep.subr.mxu0 0.0
    %240 = vmatpush1.msra.mxu0 0.0
    %241 = vmatprep.subr.mxu0 0.0
    %242 = vmatpush1.msra.mxu0 0.0
    %243 = vmatprep.subr.mxu0 0.0
    %244 = vmatpush1.msra.mxu0 0.0
    %245 = vmatprep.subr.mxu0 0.0
    %246 = vmatpush1.msra.mxu0 0.0
    %247 = vmatprep.subr.mxu0 0.0
    %248 = vmatpush1.msra.mxu0 %v97
    %249 = vmatprep.subr.mxu0 0.0
    %250 = vmatpush2.msra.mxu0 0.0
    %251 = vmatprep.subr.mxu0 0.0
    %252 = vmatpush2.msra.mxu0 0.0
    %253 = vmatprep.subr.mxu0 0.0
    %254 = vmatpush2.msra.mxu0 0.0
    %255 = vmatprep.subr.mxu0 0.0
    %256 = vmatpush2.msra.mxu0 0.0
    %257 = vmatprep.subr.mxu0 0.0
    %258 = vmatpush2.msra.mxu0 0.0
    %259 = vmatprep.subr.mxu0 0.0
    %260 = vmatpush2.msra.mxu0 0.0
    %261 = vmatprep.subr.mxu0 0.0
    %262 = vmatpush2.msra.mxu0 0.0
    %263 = vmatprep.subr.mxu0 0.0
    %264 = vmatpush2.msra.mxu0 0.0
    %265 = vmatprep.subr.mxu0 0.0
    %266 = vmatpush2.msra.mxu0 0.0
    %267 = vmatprep.subr.mxu0 0.0
    %268 = vmatpush2.msra.mxu0 0.0
    %269 = vmatprep.subr.mxu0 0.0
    %270 = vmatpush2.msra.mxu0 0.0
    %271 = vmatprep.subr.mxu0 0.0
    %272 = vmatpush2.msra.mxu0 0.0
    %273 = vmatprep.subr.mxu0 0.0
    %274 = vmatpush2.msra.mxu0 0.0
    %275 = vmatprep.subr.mxu0 0.0
    %276 = vmatpush2.msra.mxu0 0.0
    %277 = vmatprep.subr.mxu0 0.0
    %278 = vmatpush2.msra.mxu0 0.0
    %279 = vmatprep.subr.mxu0 0.0
    %280 = vmatpush2.msra.mxu0 0.0
    %281 = vmatprep.mubr.f32.mxu0 0.0
    %282 = vmatmul.mubr.f32.gmra.mxu0 %v212
    %v283 = vpop.f32.mrf.mxu0
    %v284 = vadd.f32 0.0, %v283
    %v285 = vpop.f32.mrf.mxu0
    %286 = vmatprep.mubr.f32.mxu0 0.0
    %287 = vmatmul.mubr.f32.gmra.mxu0 %v215
    %v288 = vpop.f32.mrf.mxu0
    %v289 = vadd.f32 0.0, %v288
    %v290 = vpop.f32.mrf.mxu0
    %291 = vdwg.mxu0
    %292 = vst.msk [vmem:[#allocation2 + $0x10] sm:$0xff] %vm174, %v284
    %293 = vst.msk [vmem:[#allocation2 + $0x18] sm:$0xff] %vm174, %v289
    %v294 = vld [vmem:[#allocation2] ss:$2 sm:$0x7f]
    %s295 = scalar_lea.vmem [#allocation2], 1
    %v296 = vld [vmem:[%s295] ss:$2 sm:$0x7f]
    %298 = vrot.lane.b32.xlu0 %v296, 120
    %v299 = vpop.permute.xlu0 %298
    %v301 = vadd.f32 %v294, %v299
    %s302 = scalar_lea.vmem [#allocation2], 2
    %v303 = vld [vmem:[%s302] ss:$2 sm:$0x7f]
    %305 = vrot.lane.b32.xlu0 %v303, 112
    %v306 = vpop.permute.xlu0 %305
    %v308 = vadd.f32 %v301, %v306
    %vm309 = vcmask 63488
    %310 = vst.msk [vmem:[#allocation3] sm:$0x7f] %vm309, %v308
    %s311 = scalar_lea.vmem [#allocation2], 16
    %v312 = vld [vmem:[%s311] ss:$2 sm:$0x7f]
    %s313 = scalar_lea.vmem [#allocation2], 17
    %v314 = vld [vmem:[%s313] ss:$2 sm:$0x7f]
    %316 = vrot.lane.b32.xlu0 %v314, 120
    %v317 = vpop.permute.xlu0 %316
    %v319 = vadd.f32 %v312, %v317
    %s320 = scalar_lea.vmem [#allocation2], 18
    %v321 = vld [vmem:[%s320] ss:$2 sm:$0x7f]
    %323 = vrot.lane.b32.xlu0 %v321, 112
    %v324 = vpop.permute.xlu0 %323
    %v326 = vadd.f32 %v319, %v324
    %327 = vst.msk [vmem:[#allocation3 + $0x7] sm:$0x7f] %vm309, %v326
    %v328 = vld [vmem:[#allocation3] sm:$0xff]
    %v329 = vld [vmem:[#allocation3 + $0x8] sm:$0x3f]
    %v330 = vld [vmem:[#allocation9] sm:$0x1]
    %v331 = vld [vmem:[#allocation9 + $0x1] sm:$0x1]
    %vm332 = vcmask 64512
    %v333 = vsel %vm332, %v328, 0.0
    %vm334 = vcmask 62464
    %v335 = vsel %vm334, %v329, 0.0
    %v336 = vadd.f32 %v333, %v335
    %v337 = vrot.slane %v336, 4
    %v338 = vadd.f32 %v336, %v337
    %v339 = vrot.slane %v338, 2
    %v340 = vadd.f32 %v338, %v339
    %v341 = vrot.slane %v340, 1
    %v342 = vadd.f32 %v340, %v341
    %v343 = vrcp.pop 14.0
    %v344 = vmul.f32 %v342, %v343
    %v345 = vsub.f32 %v328, %v344
    %v346 = vsub.f32 %v329, %v344
    %v347 = vmul.f32 %v345, %v345
    %v348 = vmul.f32 %v346, %v346
    %v349 = vsel %vm332, %v347, 0.0
    %v350 = vsel %vm334, %v348, 0.0
    %v351 = vadd.f32 %v349, %v350
    %v352 = vrot.slane %v351, 4
    %v353 = vadd.f32 %v351, %v352
    %v354 = vrot.slane %v353, 2
    %v355 = vadd.f32 %v353, %v354
    %v356 = vrot.slane %v355, 1
    %v357 = vadd.f32 %v355, %v356
    %v358 = vmul.f32 %v357, %v343
    %v359 = vadd.f32 %v358, 1e-05
    %v360 = vrsqrt.pop %v359
    %v361 = vmul.f32 %v345, %v360
    %v362 = vmul.f32 %v346, %v360
    %v363 = vlaneseq
    %v364 = vshrl.u32 %v363, 7
    %v365 = vsub.s32 0, %v364
    %v366 = vrot.slane %v330, %v365
    %v367 = vmul.f32 %v361, %v366
    %v368 = vmul.f32 %v362, %v366
    %v369 = vlaneseq
    %v370 = vshrl.u32 %v369, 7
    %v371 = vsub.s32 0, %v370
    %v372 = vrot.slane %v331, %v371
    %v373 = vadd.f32 %v367, %v372
    %v374 = vadd.f32 %v368, %v372
    %v375 = vmax.f32 %v373, 0.0
    %v376 = vmax.f32 %v374, 0.0
    %s377 = scalar_lea.vmem [#allocation7], 24
    %v378 = vld [vmem:[%s377] sm:$0xff]
    %v380 = vsel %vm332, %v375, 0
    %v383 = vsel %vm332, %v376, 0
    %385 = vmatprep.subr.mxu0 0.0
    %386 = vmatpush1.msra.mxu0 0.0
    %387 = vmatprep.subr.mxu0 0.0
    %388 = vmatpush1.msra.mxu0 0.0
    %389 = vmatprep.subr.mxu0 0.0
    %390 = vmatpush1.msra.mxu0 0.0
    %391 = vmatprep.subr.mxu0 0.0
    %392 = vmatpush1.msra.mxu0 0.0
    %393 = vmatprep.subr.mxu0 0.0
    %394 = vmatpush1.msra.mxu0 0.0
    %395 = vmatprep.subr.mxu0 0.0
    %396 = vmatpush1.msra.mxu0 0.0
    %397 = vmatprep.subr.mxu0 0.0
    %398 = vmatpush1.msra.mxu0 0.0
    %399 = vmatprep.subr.mxu0 0.0
    %400 = vmatpush1.msra.mxu0 0.0
    %401 = vmatprep.subr.mxu0 0.0
    %402 = vmatpush1.msra.mxu0 0.0
    %403 = vmatprep.subr.mxu0 0.0
    %404 = vmatpush1.msra.mxu0 0.0
    %405 = vmatprep.subr.mxu0 0.0
    %406 = vmatpush1.msra.mxu0 0.0
    %407 = vmatprep.subr.mxu0 0.0
    %408 = vmatpush1.msra.mxu0 0.0
    %409 = vmatprep.subr.mxu0 0.0
    %410 = vmatpush1.msra.mxu0 0.0
    %411 = vmatprep.subr.mxu0 0.0
    %412 = vmatpush1.msra.mxu0 0.0
    %413 = vmatprep.subr.mxu0 0.0
    %414 = vmatpush1.msra.mxu0 0.0
    %415 = vmatprep.subr.mxu0 0.0
    %416 = vmatpush1.msra.mxu0 %v378
    %417 = vmatprep.subr.mxu0 0.0
    %418 = vmatpush2.msra.mxu0 0.0
    %419 = vmatprep.subr.mxu0 0.0
    %420 = vmatpush2.msra.mxu0 0.0
    %421 = vmatprep.subr.mxu0 0.0
    %422 = vmatpush2.msra.mxu0 0.0
    %423 = vmatprep.subr.mxu0 0.0
    %424 = vmatpush2.msra.mxu0 0.0
    %425 = vmatprep.subr.mxu0 0.0
    %426 = vmatpush2.msra.mxu0 0.0
    %427 = vmatprep.subr.mxu0 0.0
    %428 = vmatpush2.msra.mxu0 0.0
    %429 = vmatprep.subr.mxu0 0.0
    %430 = vmatpush2.msra.mxu0 0.0
    %431 = vmatprep.subr.mxu0 0.0
    %432 = vmatpush2.msra.mxu0 0.0
    %433 = vmatprep.subr.mxu0 0.0
    %434 = vmatpush2.msra.mxu0 0.0
    %435 = vmatprep.subr.mxu0 0.0
    %436 = vmatpush2.msra.mxu0 0.0
    %437 = vmatprep.subr.mxu0 0.0
    %438 = vmatpush2.msra.mxu0 0.0
    %439 = vmatprep.subr.mxu0 0.0
    %440 = vmatpush2.msra.mxu0 0.0
    %441 = vmatprep.subr.mxu0 0.0
    %442 = vmatpush2.msra.mxu0 0.0
    %443 = vmatprep.subr.mxu0 0.0
    %444 = vmatpush2.msra.mxu0 0.0
    %445 = vmatprep.subr.mxu0 0.0
    %446 = vmatpush2.msra.mxu0 0.0
    %447 = vmatprep.subr.mxu0 0.0
    %448 = vmatpush2.msra.mxu0 0.0
    %449 = vmatprep.mubr.f32.mxu0 0.0
    %450 = vmatmul.mubr.f32.gmra.mxu0 %v380
    %v451 = vpop.f32.mrf.mxu0
    %v452 = vadd.f32 0.0, %v451
    %v453 = vpop.f32.mrf.mxu0
    %454 = vmatprep.mubr.f32.mxu0 0.0
    %455 = vmatmul.mubr.f32.gmra.mxu0 %v383
    %v456 = vpop.f32.mrf.mxu0
    %v457 = vadd.f32 0.0, %v456
    %v458 = vpop.f32.mrf.mxu0
    %459 = vdwg.mxu0
    %460 = vst.msk [vmem:[#allocation2] sm:$0xff] %vm174, %v452
    %vm461 = vcmask 193536
    %462 = vst.msk [vmem:[#allocation2 + $0x8] sm:$0x3f] %vm461, %v457
    %v463 = vld [vmem:[#allocation2] ss:$2 sm:$0x7]
    %v464 = vld [vmem:[%s295] ss:$2 sm:$0x7]
    %466 = vrot.lane.b32.xlu0 %v464, 120
    %v467 = vpop.permute.xlu0 %466
    %v469 = vadd.f32 %v463, %v467
    %v470 = vld [vmem:[%s302] ss:$2 sm:$0x7]
    %472 = vrot.lane.b32.xlu0 %v470, 112
    %v473 = vpop.permute.xlu0 %472
    %v475 = vadd.f32 %v469, %v473
    %vm476 = vcmask 59392
    %477 = vst.msk [vmem:[#allocation3] sm:$0x7] %vm476, %v475
    %s478 = scalar_lea.vmem [#allocation2], 7
    %v479 = vld [vmem:[%s478] ss:$2 sm:$0x7]
    %s480 = scalar_lea.vmem [#allocation2], 8
    %v481 = vld [vmem:[%s480] ss:$2 sm:$0x7]
    %483 = vrot.lane.b32.xlu0 %v481, 120
    %v484 = vpop.permute.xlu0 %483
    %v486 = vadd.f32 %v479, %v484
    %s487 = scalar_lea.vmem [#allocation2], 9
    %v488 = vld [vmem:[%s487] ss:$2 sm:$0x7]
    %490 = vrot.lane.b32.xlu0 %v488, 112
    %v491 = vpop.permute.xlu0 %490
    %v493 = vadd.f32 %v486, %v491
    %494 = vst.msk [vmem:[#allocation3 + $0x3] sm:$0x7] %vm476, %v493
    %v495 = vld [vmem:[#allocation3] sm:$0x3f]
    %v496 = vld [vmem:[#allocation9 + $0x2] sm:$0x1]
    %v497 = vld [vmem:[#allocation9 + $0x3] sm:$0x1]
    %v498 = vsel %vm334, %v495, 0.0
    %v499 = vrot.slane %v498, 4
    %v500 = vadd.f32 %v498, %v499
    %v501 = vrot.slane %v500, 2
    %v502 = vadd.f32 %v500, %v501
    %v503 = vrot.slane %v502, 1
    %v504 = vadd.f32 %v502, %v503
    %v505 = vrcp.pop 6.0
    %v506 = vmul.f32 %v504, %v505
    %v507 = vsub.f32 %v495, %v506
    %v508 = vmul.f32 %v507, %v507
    %v509 = vsel %vm334, %v508, 0.0
    %v510 = vrot.slane %v509, 4
    %v511 = vadd.f32 %v509, %v510
    %v512 = vrot.slane %v511, 2
    %v513 = vadd.f32 %v511, %v512
    %v514 = vrot.slane %v513, 1
    %v515 = vadd.f32 %v513, %v514
    %v516 = vmul.f32 %v515, %v505
    %v517 = vadd.f32 %v516, 1e-05
    %v518 = vrsqrt.pop %v517
    %v519 = vmul.f32 %v507, %v518
    %v520 = vlaneseq
    %v521 = vshrl.u32 %v520, 7
    %v522 = vsub.s32 0, %v521
    %v523 = vrot.slane %v496, %v522
    %v524 = vmul.f32 %v519, %v523
    %v525 = vlaneseq
    %v526 = vshrl.u32 %v525, 7
    %v527 = vsub.s32 0, %v526
    %v528 = vrot.slane %v497, %v527
    %v529 = vadd.f32 %v524, %v528
    %v530 = vmax.f32 %v529, 0.0
    %s531 = scalar_lea.vmem [#allocation7], 48
    %v532 = vld [vmem:[%s531] sm:$0xff]
    %v534 = vsel %vm332, %v530, 0
    %536 = vmatprep.subr.mxu0 0.0
    %537 = vmatpush1.msra.mxu0 0.0
    %538 = vmatprep.subr.mxu0 0.0
    %539 = vmatpush1.msra.mxu0 0.0
    %540 = vmatprep.subr.mxu0 0.0
    %541 = vmatpush1.msra.mxu0 0.0
    %542 = vmatprep.subr.mxu0 0.0
    %543 = vmatpush1.msra.mxu0 0.0
    %544 = vmatprep.subr.mxu0 0.0
    %545 = vmatpush1.msra.mxu0 0.0
    %546 = vmatprep.subr.mxu0 0.0
    %547 = vmatpush1.msra.mxu0 0.0
    %548 = vmatprep.subr.mxu0 0.0
    %549 = vmatpush1.msra.mxu0 0.0
    %550 = vmatprep.subr.mxu0 0.0
    %551 = vmatpush1.msra.mxu0 0.0
    %552 = vmatprep.subr.mxu0 0.0
    %553 = vmatpush1.msra.mxu0 0.0
    %554 = vmatprep.subr.mxu0 0.0
    %555 = vmatpush1.msra.mxu0 0.0
    %556 = vmatprep.subr.mxu0 0.0
    %557 = vmatpush1.msra.mxu0 0.0
    %558 = vmatprep.subr.mxu0 0.0
    %559 = vmatpush1.msra.mxu0 0.0
    %560 = vmatprep.subr.mxu0 0.0
    %561 = vmatpush1.msra.mxu0 0.0
    %562 = vmatprep.subr.mxu0 0.0
    %563 = vmatpush1.msra.mxu0 0.0
    %564 = vmatprep.subr.mxu0 0.0
    %565 = vmatpush1.msra.mxu0 0.0
    %566 = vmatprep.subr.mxu0 0.0
    %567 = vmatpush1.msra.mxu0 %v532
    %568 = vmatprep.subr.mxu0 0.0
    %569 = vmatpush2.msra.mxu0 0.0
    %570 = vmatprep.subr.mxu0 0.0
    %571 = vmatpush2.msra.mxu0 0.0
    %572 = vmatprep.subr.mxu0 0.0
    %573 = vmatpush2.msra.mxu0 0.0
    %574 = vmatprep.subr.mxu0 0.0
    %575 = vmatpush2.msra.mxu0 0.0
    %576 = vmatprep.subr.mxu0 0.0
    %577 = vmatpush2.msra.mxu0 0.0
    %578 = vmatprep.subr.mxu0 0.0
    %579 = vmatpush2.msra.mxu0 0.0
    %580 = vmatprep.subr.mxu0 0.0
    %581 = vmatpush2.msra.mxu0 0.0
    %582 = vmatprep.subr.mxu0 0.0
    %583 = vmatpush2.msra.mxu0 0.0
    %584 = vmatprep.subr.mxu0 0.0
    %585 = vmatpush2.msra.mxu0 0.0
    %586 = vmatprep.subr.mxu0 0.0
    %587 = vmatpush2.msra.mxu0 0.0
    %588 = vmatprep.subr.mxu0 0.0
    %589 = vmatpush2.msra.mxu0 0.0
    %590 = vmatprep.subr.mxu0 0.0
    %591 = vmatpush2.msra.mxu0 0.0
    %592 = vmatprep.subr.mxu0 0.0
    %593 = vmatpush2.msra.mxu0 0.0
    %594 = vmatprep.subr.mxu0 0.0
    %595 = vmatpush2.msra.mxu0 0.0
    %596 = vmatprep.subr.mxu0 0.0
    %597 = vmatpush2.msra.mxu0 0.0
    %598 = vmatprep.subr.mxu0 0.0
    %599 = vmatpush2.msra.mxu0 0.0
    %600 = vmatprep.mubr.f32.mxu0 0.0
    %601 = vmatmul.mubr.f32.gmra.mxu0 %v534
    %v602 = vpop.f32.mrf.mxu0
    %v603 = vadd.f32 0.0, %v602
    %v604 = vpop.f32.mrf.mxu0
    %605 = vdwg.mxu0
    %606 = vst.msk [vmem:[#allocation2] sm:$0x3f] %vm461, %v603
    %v607 = vld [vmem:[#allocation2] ss:$2 sm:$0x1]
    %v608 = vld [vmem:[%s295] ss:$2 sm:$0x1]
    %610 = vrot.lane.b32.xlu0 %v608, 120
    %v611 = vpop.permute.xlu0 %610
    %v613 = vadd.f32 %v607, %v611
    %v614 = vld [vmem:[%s302] ss:$2 sm:$0x1]
    %616 = vrot.lane.b32.xlu0 %v614, 112
    %v617 = vpop.permute.xlu0 %616
    %v619 = vadd.f32 %v613, %v617
    %vm620 = vcmask 57344
    %621 = vst.msk [vmem:[#allocation3] sm:$0x1] %vm620, %v619
    %s622 = scalar_lea.vmem [#allocation2], 3
    %v623 = vld [vmem:[%s622] ss:$2 sm:$0x1]
    %s624 = scalar_lea.vmem [#allocation2], 4
    %v625 = vld [vmem:[%s624] ss:$2 sm:$0x1]
    %627 = vrot.lane.b32.xlu0 %v625, 120
    %v628 = vpop.permute.xlu0 %627
    %v630 = vadd.f32 %v623, %v628
    %s631 = scalar_lea.vmem [#allocation2], 5
    %v632 = vld [vmem:[%s631] ss:$2 sm:$0x1]
    %634 = vrot.lane.b32.xlu0 %v632, 112
    %v635 = vpop.permute.xlu0 %634
    %v637 = vadd.f32 %v630, %v635
    %638 = vst.msk [vmem:[#allocation3 + $0x1] sm:$0x1] %vm620, %v637
    %v639 = vld [vmem:[#allocation3] sm:$0x3]
    %v640 = vld [vmem:[#allocation9 + $0x4] sm:$0x1]
    %v641 = vld [vmem:[#allocation9 + $0x5] sm:$0x1]
    %vm642 = vcmask 58368
    %v643 = vsel %vm642, %v639, 0.0
    %v644 = vrot.slane %v643, 4
    %v645 = vadd.f32 %v643, %v644
    %v646 = vrot.slane %v645, 2
    %v647 = vadd.f32 %v645, %v646
    %v648 = vrot.slane %v647, 1
    %v649 = vadd.f32 %v647, %v648
    %v650 = vrcp.pop 2.0
    %v651 = vmul.f32 %v649, %v650
    %v652 = vsub.f32 %v639, %v651
    %v653 = vmul.f32 %v652, %v652
    %v654 = vsel %vm642, %v653, 0.0
    %v655 = vrot.slane %v654, 4
    %v656 = vadd.f32 %v654, %v655
    %v657 = vrot.slane %v656, 2
    %v658 = vadd.f32 %v656, %v657
    %v659 = vrot.slane %v658, 1
    %v660 = vadd.f32 %v658, %v659
    %v661 = vmul.f32 %v660, %v650
    %v662 = vadd.f32 %v661, 1e-05
    %v663 = vrsqrt.pop %v662
    %v664 = vmul.f32 %v652, %v663
    %v665 = vlaneseq
    %v666 = vshrl.u32 %v665, 7
    %v667 = vsub.s32 0, %v666
    %v668 = vrot.slane %v640, %v667
    %v669 = vmul.f32 %v664, %v668
    %v670 = vlaneseq
    %v671 = vshrl.u32 %v670, 7
    %v672 = vsub.s32 0, %v671
    %v673 = vrot.slane %v641, %v672
    %v674 = vadd.f32 %v669, %v673
    %v675 = vmax.f32 %v674, 0.0
    %s676 = scalar_lea.vmem [#allocation7], 72
    %v677 = vld [vmem:[%s676] sm:$0xff]
    %v678 = vld [vmem:[#allocation9 + $0x6] sm:$0x1]
    %v679 = vlaneseq
    %v680 = vshrl.u32 %v679, 7
    %v681 = vsub.s32 0, %v680
    %v682 = vrot.slane %v678, %v681
    %v684 = vsel %vm332, %v675, 0
    %686 = vmatprep.subr.mxu0 0.0
    %687 = vmatpush1.msra.mxu0 0.0
    %688 = vmatprep.subr.mxu0 0.0
    %689 = vmatpush1.msra.mxu0 0.0
    %690 = vmatprep.subr.mxu0 0.0
    %691 = vmatpush1.msra.mxu0 0.0
    %692 = vmatprep.subr.mxu0 0.0
    %693 = vmatpush1.msra.mxu0 0.0
    %694 = vmatprep.subr.mxu0 0.0
    %695 = vmatpush1.msra.mxu0 0.0
    %696 = vmatprep.subr.mxu0 0.0
    %697 = vmatpush1.msra.mxu0 0.0
    %698 = vmatprep.subr.mxu0 0.0
    %699 = vmatpush1.msra.mxu0 0.0
    %700 = vmatprep.subr.mxu0 0.0
    %701 = vmatpush1.msra.mxu0 0.0
    %702 = vmatprep.subr.mxu0 0.0
    %703 = vmatpush1.msra.mxu0 0.0
    %704 = vmatprep.subr.mxu0 0.0
    %705 = vmatpush1.msra.mxu0 0.0
    %706 = vmatprep.subr.mxu0 0.0
    %707 = vmatpush1.msra.mxu0 0.0
    %708 = vmatprep.subr.mxu0 0.0
    %709 = vmatpush1.msra.mxu0 0.0
    %710 = vmatprep.subr.mxu0 0.0
    %711 = vmatpush1.msra.mxu0 0.0
    %712 = vmatprep.subr.mxu0 0.0
    %713 = vmatpush1.msra.mxu0 0.0
    %714 = vmatprep.subr.mxu0 0.0
    %715 = vmatpush1.msra.mxu0 0.0
    %716 = vmatprep.subr.mxu0 0.0
    %717 = vmatpush1.msra.mxu0 %v677
    %718 = vmatprep.subr.mxu0 0.0
    %719 = vmatpush2.msra.mxu0 0.0
    %720 = vmatprep.subr.mxu0 0.0
    %721 = vmatpush2.msra.mxu0 0.0
    %722 = vmatprep.subr.mxu0 0.0
    %723 = vmatpush2.msra.mxu0 0.0
    %724 = vmatprep.subr.mxu0 0.0
    %725 = vmatpush2.msra.mxu0 0.0
    %726 = vmatprep.subr.mxu0 0.0
    %727 = vmatpush2.msra.mxu0 0.0
    %728 = vmatprep.subr.mxu0 0.0
    %729 = vmatpush2.msra.mxu0 0.0
    %730 = vmatprep.subr.mxu0 0.0
    %731 = vmatpush2.msra.mxu0 0.0
    %732 = vmatprep.subr.mxu0 0.0
    %733 = vmatpush2.msra.mxu0 0.0
    %734 = vmatprep.subr.mxu0 0.0
    %735 = vmatpush2.msra.mxu0 0.0
    %736 = vmatprep.subr.mxu0 0.0
    %737 = vmatpush2.msra.mxu0 0.0
    %738 = vmatprep.subr.mxu0 0.0
    %739 = vmatpush2.msra.mxu0 0.0
    %740 = vmatprep.subr.mxu0 0.0
    %741 = vmatpush2.msra.mxu0 0.0
    %742 = vmatprep.subr.mxu0 0.0
    %743 = vmatpush2.msra.mxu0 0.0
    %744 = vmatprep.subr.mxu0 0.0
    %745 = vmatpush2.msra.mxu0 0.0
    %746 = vmatprep.subr.mxu0 0.0
    %747 = vmatpush2.msra.mxu0 0.0
    %748 = vmatprep.subr.mxu0 0.0
    %749 = vmatpush2.msra.mxu0 0.0
    %750 = vmatprep.mubr.f32.mxu0 0.0
    %751 = vmatmul.mubr.f32.gmra.mxu0 %v684
    %v752 = vpop.f32.mrf.mxu0
    %v753 = vadd.f32 %v682, %v752
    %v754 = vpop.f32.mrf.mxu0
    %755 = vdwg.mxu0
    %v756 = vmax.f32 %v753, 0.0
    %s757 = scalar_lea.vmem [#allocation7], 96
    %v758 = vld [vmem:[%s757] sm:$0xff]
    %v759 = vld [vmem:[%s757 + $0x8] sm:$0xff]
    %v760 = vld [vmem:[%s757 + $0x10] sm:$0xff]
    %v761 = vld [vmem:[#allocation9 + $0x7] sm:$0x1]
    %v762 = vlaneseq
    %v763 = vshrl.u32 %v762, 7
    %v764 = vsub.s32 0, %v763
    %v765 = vrot.slane %v761, %v764
    %v767 = vsel %vm174, %v756, 0
    %769 = vmatprep.subr.mxu0 0.0
    %770 = vmatpush1.msra.mxu0 0.0
    %771 = vmatprep.subr.mxu0 0.0
    %772 = vmatpush1.msra.mxu0 0.0
    %773 = vmatprep.subr.mxu0 0.0
    %774 = vmatpush1.msra.mxu0 0.0
    %775 = vmatprep.subr.mxu0 0.0
    %776 = vmatpush1.msra.mxu0 0.0
    %777 = vmatprep.subr.mxu0 0.0
    %778 = vmatpush1.msra.mxu0 0.0
    %779 = vmatprep.subr.mxu0 0.0
    %780 = vmatpush1.msra.mxu0 0.0
    %781 = vmatprep.subr.mxu0 0.0
    %782 = vmatpush1.msra.mxu0 0.0
    %783 = vmatprep.subr.mxu0 0.0
    %784 = vmatpush1.msra.mxu0 0.0
    %785 = vmatprep.subr.mxu0 0.0
    %786 = vmatpush1.msra.mxu0 0.0
    %787 = vmatprep.subr.mxu0 0.0
    %788 = vmatpush1.msra.mxu0 0.0
    %789 = vmatprep.subr.mxu0 0.0
    %790 = vmatpush1.msra.mxu0 0.0
    %791 = vmatprep.subr.mxu0 0.0
    %792 = vmatpush1.msra.mxu0 0.0
    %793 = vmatprep.subr.mxu0 0.0
    %794 = vmatpush1.msra.mxu0 0.0
    %795 = vmatprep.subr.mxu0 0.0
    %796 = vmatpush1.msra.mxu0 %v760
    %797 = vmatprep.subr.mxu0 0.0
    %798 = vmatpush1.msra.mxu0 %v759
    %799 = vmatprep.subr.mxu0 0.0
    %800 = vmatpush1.msra.mxu0 %v758
    %801 = vmatprep.subr.mxu0 0.0
    %802 = vmatpush2.msra.mxu0 0.0
    %803 = vmatprep.subr.mxu0 0.0
    %804 = vmatpush2.msra.mxu0 0.0
    %805 = vmatprep.subr.mxu0 0.0
    %806 = vmatpush2.msra.mxu0 0.0
    %807 = vmatprep.subr.mxu0 0.0
    %808 = vmatpush2.msra.mxu0 0.0
    %809 = vmatprep.subr.mxu0 0.0
    %810 = vmatpush2.msra.mxu0 0.0
    %811 = vmatprep.subr.mxu0 0.0
    %812 = vmatpush2.msra.mxu0 0.0
    %813 = vmatprep.subr.mxu0 0.0
    %814 = vmatpush2.msra.mxu0 0.0
    %815 = vmatprep.subr.mxu0 0.0
    %816 = vmatpush2.msra.mxu0 0.0
    %817 = vmatprep.subr.mxu0 0.0
    %818 = vmatpush2.msra.mxu0 0.0
    %819 = vmatprep.subr.mxu0 0.0
    %820 = vmatpush2.msra.mxu0 0.0
    %821 = vmatprep.subr.mxu0 0.0
    %822 = vmatpush2.msra.mxu0 0.0
    %823 = vmatprep.subr.mxu0 0.0
    %824 = vmatpush2.msra.mxu0 0.0
    %825 = vmatprep.subr.mxu0 0.0
    %826 = vmatpush2.msra.mxu0 0.0
    %827 = vmatprep.subr.mxu0 0.0
    %828 = vmatpush2.msra.mxu0 0.0
    %829 = vmatprep.subr.mxu0 0.0
    %830 = vmatpush2.msra.mxu0 0.0
    %831 = vmatprep.subr.mxu0 0.0
    %832 = vmatpush2.msra.mxu0 0.0
    %833 = vmatprep.mubr.f32.mxu0 0.0
    %834 = vmatmul.mubr.f32.gmra.mxu0 %v767
    %v835 = vpop.f32.mrf.mxu0
    %v836 = vadd.f32 %v765, %v835
    %v837 = vpop.f32.mrf.mxu0
    %838 = vdwg.mxu0
    %vm839 = vcmask 1041408
    %v840 = vsel %vm839, %v836, -inf
    %841 = vmax.xlane.f32.xlu0 %v840
    %v842 = vpop.xlane.xlu0 %841
    %v843 = vsub.f32 %v836, %v842
    %v844 = vmul.f32 %v843, 1.442695
    %v845 = vpow.pop %v844
    %v846 = vsel %vm839, %v845, 0.0
    %847 = vadd.xlane.f32.xlu0 %v846
    %v848 = vpop.xlane.xlu0 %847
    %v849 = vrcp.pop %v848
    %v850 = vmul.f32 %v848, %v849
    %v851 = vsub.f32 2.0, %v850
    %v852 = vmul.f32 %v849, %v851
    %v853 = vmul.f32 %v845, %v852
    %854 = vst [vmem:[#allocation10] sm:$0x3] %v853
    // Predicated region
    $region26: #{cnn_classifier_forward.1} parent=1 // pred_check
      _
    $region27: #{cnn_classifier_forward.1} parent=1 // pred_check_branch
      %856 = sbr.rel (0) target = $region29
    $region28: #{cnn_classifier_forward.1} parent=1 // pred_region
      %s858 = ssub.s32 32, 32
      %859 = vsyncadd [#allocation6], %s858
      %s861 = sshll.u32 [#allocation10], 4
      %s862 = int_to_ptr.vmem [resolvable:$true] %s861
      %864 = dma.vmem_to_hbm [thread:$0]  %s862, 32, %s3, [#allocation6]
    $region29: #{cnn_classifier_forward.1} parent=1 // pred_fallthru
      _
    // Predicated region
    $region30: #{cnn_classifier_forward.1} parent=1 // pred_check
      _
    $region31: #{cnn_classifier_forward.1} parent=1 // pred_check_branch
      %866 = sbr.rel (0) target = $region33
    $region32: #{cnn_classifier_forward.1} parent=1 // pred_region
      %867 = dma.done [#allocation6], 32
    $region33: #{cnn_classifier_forward.1} parent=1 // pred_fallthru
      _
    %868 = vsyncpa [#allocation5], 1
    %869 = vsyncpa [#allocation8], 1
    %870 = vsyncpa [#allocation6], 1

</llo_original>
